<compile_context>
chip_gen: v7x
topology: tpu7x:2x2x1
jax: 0.10.0
libtpu: 0.0.40
codegen_flags: <defaults>
</compile_context>

<pallas_src>
import jax
import jax.numpy as jnp
from jax.experimental import pallas as pl
from jax.experimental.pallas import tpu as pltpu

NEG_SLOPE = 0.01                       # torch.nn.LeakyReLU default negative_slope
_NT_DIMS = (((1,), (1,)), ((), ()))    # contract both minor dims (q @ k.T pattern)


def _round_up(x: int, m: int) -> int:
    return ((x + m - 1) // m) * m


def _batch_semantics(num_steps):
    """Grid-axis semantics for the batch axis.

    v7x has 2 TensorCores per chip and only CORE_PARALLEL actually shards grid
    steps across them; single-TC chips (v5e/v6e) keep plain "parallel".
    """
    try:
        kind = jax.devices()[0].device_kind.lower()
    except Exception:
        kind = ""
    if (num_steps >= 2 and hasattr(pltpu, "CORE_PARALLEL")
            and ("v7" in kind or "tpu7" in kind)):
        return (pltpu.CORE_PARALLEL,)
    return ("parallel",)


def _make_kernel(n_chain, chain_douts, col_offs, d_pen, pen_off, has_reduce,
                 x_transposed):
    """Build the MLP kernel for one static layer configuration.

    Kernel refs (in order):
      x_ref           : (tile_b, D) f32  if not x_transposed (zero-copy path)
                        (D, tile_b) bf16 if x_transposed   (fallback path)
      w_refs[0..n-1]  : (dout_i, din_i) bf16   transposed chain weights (MXU)
      col_ref         : (total, 1) f32         chain biases (+ ->1 weight) stacked
      scal_ref        : (3,) f32 SMEM          [b_pen, w_fin, b_fin]
      out_ref         : (1, tile_b) f32        lane-dense output slab
    """

    def kernel(x_ref, *refs):
        w_refs = refs[:n_chain]
        col_ref = refs[n_chain]
        scal_ref = refs[n_chain + 1]
        out_ref = refs[n_chain + 2]

        if x_transposed:
            h_bf = x_ref[...]                          # (D, tile_b) bf16
            x_bf = None
        else:
            x_bf = x_ref[...].astype(jnp.bfloat16)     # (tile_b, D) bf16
            h_bf = None

        h_f32 = None
        for i in range(n_chain):
            wt = w_refs[i][...]                                       # (dout, din) bf16
            b = col_ref[col_offs[i]:col_offs[i] + chain_douts[i], :]  # (dout, 1) f32
            if i == 0 and not x_transposed:
                # Fold the batch transpose into the matmul: W^T @ x^T with the
                # rhs contracted on its minor dim (flash-attention NT pattern).
                z = jax.lax.dot_general(wt, x_bf, _NT_DIMS,
                                        preferred_element_type=jnp.float32)
            else:
                z = jnp.dot(wt, h_bf, preferred_element_type=jnp.float32)
            z = z + b                                  # f32 bias add (VPU)
            h_f32 = jnp.maximum(z, NEG_SLOPE * z)      # LeakyReLU: mul + max
            if i + 1 < n_chain:
                h_bf = h_f32.astype(jnp.bfloat16)      # only to feed the MXU

        if has_reduce:
            # (hidden_last -> 1) Linear + LeakyReLU kept off the MXU:
            # broadcast multiply + cross-sublane reduce, all f32.
            w_pen = col_ref[pen_off:pen_off + d_pen, :]        # (d_pen, 1) f32
            r = jnp.sum(h_f32 * w_pen, axis=0, keepdims=True) + scal_ref[0]
            r = jnp.maximum(r, NEG_SLOPE * r)
        else:
            r = h_f32                                          # (1, tile_b)

        # Final Linear(1, 1): scalar affine folded into the store epilogue.
        out_ref[...] = (r * scal_ref[1] + scal_ref[2]).astype(out_ref.dtype)

    return kernel


def reward_encoder_forward(state, params, *, tile_b=None):
    """Run the RewardEncoder MLP (eval mode) with a Pallas TPU kernel.

    state : (B, input_dim) float32
    params: list of (W, b) pairs: the len(hidden_dims)+1 loop Linears followed
            by the final Linear(1, 1).  W: (in_dim, out_dim), b: (1, out_dim).
    returns (B, 1) float32
    """
    state = jnp.asarray(state, jnp.float32)
    B, D = state.shape
    n_linear = len(params)
    assert n_linear >= 2, "need the loop Linear(s) plus the final Linear(1,1)"
    n_loop = n_linear - 1              # Linear -> LeakyReLU (-> Dropout) layers
    has_reduce = n_loop >= 2           # keep the last ->1 loop layer off the MXU
    n_chain = n_loop - 1 if has_reduce else n_loop

    # ---- batch tile --------------------------------------------------------
    if tile_b is None:
        cap = 8192                      # ~14 MiB/step working set << 32 MiB vmem limit
        tile_b = min(cap, _round_up(B, 128))
        if _round_up(B, 128) >= 256:    # keep >= 2 grid steps (one per v7x TC)
            tile_b = min(tile_b, max(128, _round_up(_round_up(B, 128) // 2, 128)))
    tile_b = max(128, _round_up(int(tile_b), 128))
    b_pad = _round_up(B, tile_b)
    num_steps = b_pad // tile_b

    # ---- parameter packing (hoist out of the kernel; fold under jit) -------
    w_chain, chain_douts, col_parts, col_offs = [], [], [], []
    off = 0
    for i in range(n_chain):
        w, b = params[i]
        dout = int(w.shape[1])
        w_chain.append(jnp.asarray(w, jnp.float32).T.astype(jnp.bfloat16))  # (dout, din)
        chain_douts.append(dout)
        col_offs.append(off)
        seg = jnp.asarray(b, jnp.float32).reshape(dout, 1)
        col_parts.append(jnp.pad(seg, ((0, _round_up(dout, 8) - dout), (0, 0))))
        off += _round_up(dout, 8)
    if has_reduce:
        w_pen, b_pen = params[n_loop - 1]
        d_pen = int(w_pen.shape[0])
        pen_off = off
        seg = jnp.asarray(w_pen, jnp.float32).reshape(d_pen, 1)
        col_parts.append(jnp.pad(seg, ((0, _round_up(d_pen, 8) - d_pen), (0, 0))))
        off += _round_up(d_pen, 8)
        b_pen_val = jnp.asarray(b_pen, jnp.float32).reshape(())
    else:
        d_pen, pen_off = 0, 0
        b_pen_val = jnp.zeros((), jnp.float32)
    colvec = jnp.concatenate(col_parts, axis=0)            # (total, 1) f32
    w_fin, b_fin = params[-1]
    scalars = jnp.stack([b_pen_val,
                         jnp.asarray(w_fin, jnp.float32).reshape(()),
                         jnp.asarray(b_fin, jnp.float32).reshape(())])  # (3,) f32

    def _const_spec(arr):
        # Constant index_map => Pallas DMAs this tensor once, not per grid step.
        return pl.BlockSpec(arr.shape, lambda i: (0,) * arr.ndim)

    common_specs = ([_const_spec(w) for w in w_chain]
                    + [_const_spec(colvec),
                       pl.BlockSpec(memory_space=pltpu.MemorySpace.SMEM)])

    def _run(fused, semantics):
        kern = _make_kernel(n_chain, tuple(chain_douts), tuple(col_offs),
                            d_pen, pen_off, has_reduce, x_transposed=not fused)
        if fused:
            # Zero-copy input path: kernel reads the (tile_b, D) f32 state tile
            # directly (no pad+cast+transpose HBM round trip in the wrapper).
            x_in = jnp.pad(state, ((0, b_pad - B), (0, 0)))
            x_spec = pl.BlockSpec((tile_b, D), lambda i: (i, 0))
        else:
            # Previously-validated fallback: batch-on-lanes bf16 input slab
            # materialized by the wrapper.
            x_in = jnp.pad(state.astype(jnp.bfloat16), ((0, b_pad - B), (0, 0))).T
            x_spec = pl.BlockSpec((D, tile_b), lambda i: (0, i))

        out = pl.pallas_call(
            kern,
            out_shape=jax.ShapeDtypeStruct((1, b_pad), jnp.float32),
            grid_spec=pltpu.PrefetchScalarGridSpec(
                num_scalar_prefetch=0,
                grid=(num_steps,),
                in_specs=[x_spec] + common_specs,
                out_specs=pl.BlockSpec((1, tile_b), lambda i: (0, i)),
            ),
            compiler_params=pltpu.CompilerParams(
                dimension_semantics=semantics,
                # plenty of headroom on v5e/v6e (128 MiB VMEM) and v7x (64 MiB)
                vmem_limit_bytes=32 * 1024 * 1024,
            ),
        )(x_in, *w_chain, colvec, scalars)
        return out[:, :B].T                                   # (B, 1) f32

    # Preferred configuration first; retry without CORE_PARALLEL, then fall
    # back to the previously-validated transposed-input layout if the
    # zero-copy NT-matmul variant ever fails to lower on an older toolchain.
    attempts = [(True, _batch_semantics(num_steps))]
    if attempts[0][1] != ("parallel",):
        attempts.append((True, ("parallel",)))
    attempts.append((False, ("parallel",)))
    err = None
    for fused, sem in attempts:
        try:
            return _run(fused, sem)
        except Exception as e:           # lowering safety net
            err = e
    raise err


def init_reward_encoder_params(key, n_dct_fns, n_actions, hidden_dims):
    """Deterministic parameter init matching the torch module's layer shapes."""
    input_dim = n_dct_fns ** 2 + n_actions
    dims = [input_dim] + list(hidden_dims) + [1]
    layer_dims = [(dims[i], dims[i + 1]) for i in range(len(dims) - 1)]
    layer_dims.append((dims[-1], 1))            # final Linear(1, 1)

    params = []
    for din, dout in layer_dims:
        key, kw, kb = jax.random.split(key, 3)
        bound = 1.0 / float(din) ** 0.5          # PyTorch Linear default init range
        w = jax.random.uniform(kw, (din, dout), jnp.float32, -bound, bound)
        b = jax.random.uniform(kb, (1, dout), jnp.float32, -bound, bound)
        params.append((w, b))
    return params


def _reference_forward_f32(state, params):
    """Exact PyTorch-module (eval mode) semantics, f32 throughout."""
    h = jnp.asarray(state, jnp.float32)
    for i, (w, b) in enumerate(params):
        h = h @ jnp.asarray(w, jnp.float32) + jnp.asarray(b, jnp.float32).reshape(1, -1)
        if i < len(params) - 1:
            h = jnp.maximum(h, NEG_SLOPE * h)
    return h


def _reference_forward_bf16(state, params):
    """Pure-JAX reference mirroring the kernel's precision recipe
    (bf16 MXU inputs, f32 accumulation / elementwise math)."""
    n_loop = len(params) - 1
    has_reduce = n_loop >= 2
    n_chain = n_loop - 1 if has_reduce else n_loop
    h_bf = jnp.asarray(state, jnp.float32).astype(jnp.bfloat16)
    h_f32 = None
    for i in range(n_chain):
        w, b = params[i]
        z = jnp.dot(h_bf, jnp.asarray(w, jnp.float32).astype(jnp.bfloat16),
                    preferred_element_type=jnp.float32)
        z = z + jnp.asarray(b, jnp.float32).reshape(1, -1)
        h_f32 = jnp.maximum(z, NEG_SLOPE * z)
        if i + 1 < n_chain:
            h_bf = h_f32.astype(jnp.bfloat16)
    if has_reduce:
        w_pen, b_pen = params[n_loop - 1]
        r = h_f32 @ jnp.asarray(w_pen, jnp.float32) + jnp.asarray(b_pen, jnp.float32).reshape(1, 1)
        r = jnp.maximum(r, NEG_SLOPE * r)
    else:
        r = h_f32
    w_fin, b_fin = params[-1]
    return (r * jnp.asarray(w_fin, jnp.float32).reshape(())
            + jnp.asarray(b_fin, jnp.float32).reshape(()))


if __name__ == "__main__":
    # Small shapes consistent with the module.
    n_dct_fns, n_actions = 4, 4
    hidden_dims = [32, 32]
    input_dim = n_dct_fns ** 2 + n_actions       # 20

    key = jax.random.PRNGKey(0)
    key, k_params = jax.random.split(key)
    params = init_reward_encoder_params(k_params, n_dct_fns, n_actions, hidden_dims)

    for batch in (8, 384):                       # padded single-step and 2-step grids
        key, k_state = jax.random.split(key)
        state = jax.random.normal(k_state, (batch, input_dim), jnp.float32)

        out = jax.block_until_ready(reward_encoder_forward(state, params))
        assert out.shape == (batch, 1), out.shape

        # Tight check vs. a pure-JAX reference using the kernel's precision.
        ref_bf16 = _reference_forward_bf16(state, params)
        assert jnp.allclose(out, ref_bf16, atol=2e-3, rtol=2e-3)

        # Loose check vs. exact f32 PyTorch semantics (bf16 rounding only).
        ref_f32 = _reference_forward_f32(state, params)
        assert jnp.allclose(out, ref_f32, atol=2e-2, rtol=2e-2)

    print("KERNEL_OK")
</pallas_src>

<mosaic_0001>
module attributes {stable_mosaic.version = 11 : i64} {
  func.func @kernel(%arg0: i32, %arg1: memref<128x20xf32, #tpu.memory_space<vmem>>, %arg2: memref<32x20xbf16, #tpu.memory_space<vmem>>, %arg3: memref<32x32xbf16, #tpu.memory_space<vmem>>, %arg4: memref<96x1xf32, #tpu.memory_space<vmem>>, %arg5: memref<3xf32, #tpu.memory_space<smem>>, %arg6: memref<1x128xf32, #tpu.memory_space<vmem>>) attributes {dimension_semantics = [#tpu.dimension_semantics<parallel>], iteration_bounds = array<i64: 1>, scalar_prefetch = 0 : i64, scratch_operands = 0 : i64, tpu.core_type = #tpu.core_type<tc>, window_params = [{transform_indices = @transform_0, window_bounds = array<i64: 128, 20>}, {pipeline_mode = #tpu.pipeline_mode<synchronous>, transform_indices = @transform_1, window_bounds = array<i64: 32, 20>}, {pipeline_mode = #tpu.pipeline_mode<synchronous>, transform_indices = @transform_2, window_bounds = array<i64: 32, 32>}, {pipeline_mode = #tpu.pipeline_mode<synchronous>, transform_indices = @transform_3, window_bounds = array<i64: 96, 1>}, {transform_indices = @transform_4, window_bounds = array<i64: 3>}, {transform_indices = @transform_5, window_bounds = array<i64: 1, 128>}]} {
    %c0 = arith.constant 0 : index
    %c0_0 = arith.constant 0 : index
    %0 = vector.load %arg1[%c0, %c0_0] : memref<128x20xf32, #tpu.memory_space<vmem>>, vector<128x20xf32>
    %1 = arith.truncf %0 : vector<128x20xf32> to vector<128x20xbf16>
    %c0_1 = arith.constant 0 : index
    %c0_2 = arith.constant 0 : index
    %2 = vector.load %arg2[%c0_1, %c0_2] : memref<32x20xbf16, #tpu.memory_space<vmem>>, vector<32x20xbf16>
    %c0_3 = arith.constant 0 : index
    %c0_4 = arith.constant 0 : index
    %3 = vector.load %arg4[%c0_3, %c0_4] : memref<96x1xf32, #tpu.memory_space<vmem>>, vector<32x1xf32>
    %cst = arith.constant dense<0.000000e+00> : vector<32x128xf32>
    %4 = tpu.matmul %2, %1, %cst {dimension_numbers = #tpu.dot_dimension_numbers<[1], [1], [0], [0], [0, 0, 1, 0], [], []>} : vector<32x20xbf16>, vector<128x20xbf16>, vector<32x128xf32> -> vector<32x128xf32>
    %5 = vector.broadcast %3 : vector<32x1xf32> to vector<32x128xf32>
    %6 = arith.addf %4, %5 : vector<32x128xf32>
    %cst_5 = arith.constant 0.00999999977 : f32
    %7 = vector.broadcast %cst_5 : f32 to vector<32x128xf32>
    %8 = arith.mulf %7, %6 : vector<32x128xf32>
    %9 = arith.maximumf %6, %8 : vector<32x128xf32>
    %10 = arith.truncf %9 : vector<32x128xf32> to vector<32x128xbf16>
    %c0_6 = arith.constant 0 : index
    %c0_7 = arith.constant 0 : index
    %11 = vector.load %arg3[%c0_6, %c0_7] : memref<32x32xbf16, #tpu.memory_space<vmem>>, vector<32x32xbf16>
    %c32 = arith.constant 32 : index
    %c0_8 = arith.constant 0 : index
    %12 = vector.load %arg4[%c32, %c0_8] : memref<96x1xf32, #tpu.memory_space<vmem>>, vector<32x1xf32>
    %cst_9 = arith.constant dense<0.000000e+00> : vector<32x128xf32>
    %13 = tpu.matmul %11, %10, %cst_9 {dimension_numbers = #tpu.dot_dimension_numbers<[1], [0], [0], [1], [0, 0, 1, 1], [], []>} : vector<32x32xbf16>, vector<32x128xbf16>, vector<32x128xf32> -> vector<32x128xf32>
    %14 = vector.broadcast %12 : vector<32x1xf32> to vector<32x128xf32>
    %15 = arith.addf %13, %14 : vector<32x128xf32>
    %cst_10 = arith.constant 0.00999999977 : f32
    %16 = vector.broadcast %cst_10 : f32 to vector<32x128xf32>
    %17 = arith.mulf %16, %15 : vector<32x128xf32>
    %18 = arith.maximumf %15, %17 : vector<32x128xf32>
    %c64 = arith.constant 64 : index
    %c0_11 = arith.constant 0 : index
    %19 = vector.load %arg4[%c64, %c0_11] : memref<96x1xf32, #tpu.memory_space<vmem>>, vector<32x1xf32>
    %20 = vector.broadcast %19 : vector<32x1xf32> to vector<32x128xf32>
    %21 = arith.mulf %18, %20 : vector<32x128xf32>
    %cst_12 = arith.constant dense<0.000000e+00> : vector<128xf32>
    %22 = vector.multi_reduction <add>, %21, %cst_12 [0] : vector<32x128xf32> to vector<128xf32>
    %23 = vector.shape_cast %22 : vector<128xf32> to vector<1x128xf32>
    %c0_13 = arith.constant 0 : index
    %24 = memref.load %arg5[%c0_13] : memref<3xf32, #tpu.memory_space<smem>>
    %25 = vector.broadcast %24 : f32 to vector<1x128xf32>
    %26 = arith.addf %23, %25 : vector<1x128xf32>
    %cst_14 = arith.constant 0.00999999977 : f32
    %27 = vector.broadcast %cst_14 : f32 to vector<1x128xf32>
    %28 = arith.mulf %27, %26 : vector<1x128xf32>
    %29 = arith.maximumf %26, %28 : vector<1x128xf32>
    %c1 = arith.constant 1 : index
    %30 = memref.load %arg5[%c1] : memref<3xf32, #tpu.memory_space<smem>>
    %31 = vector.broadcast %30 : f32 to vector<1x128xf32>
    %32 = arith.mulf %29, %31 : vector<1x128xf32>
    %c2 = arith.constant 2 : index
    %33 = memref.load %arg5[%c2] : memref<3xf32, #tpu.memory_space<smem>>
    %34 = vector.broadcast %33 : f32 to vector<1x128xf32>
    %35 = arith.addf %32, %34 : vector<1x128xf32>
    %c0_15 = arith.constant 0 : index
    %c0_16 = arith.constant 0 : index
    %36 = vector.load %arg6[%c0_15, %c0_16] : memref<1x128xf32, #tpu.memory_space<vmem>>, vector<1x128xf32>
    tpu.vector_store %arg6[%c0_15, %c0_16], %35 {strides = array<i32>} : memref<1x128xf32, #tpu.memory_space<vmem>>, vector<1x128xf32>,
    return
  }
  func.func @transform_0(%arg0: i32) -> (i32, i32) {
    %c0_i32 = arith.constant 0 : i32
    %c0_i32_0 = arith.constant 0 : i32
    return %arg0, %c0_i32 : i32, i32
  }
  func.func @transform_1(%arg0: i32) -> (i32, i32) {
    %c0_i32 = arith.constant 0 : i32
    %c0_i32_0 = arith.constant 0 : i32
    %c0_i32_1 = arith.constant 0 : i32
    return %c0_i32, %c0_i32_0 : i32, i32
  }
  func.func @transform_2(%arg0: i32) -> (i32, i32) {
    %c0_i32 = arith.constant 0 : i32
    %c0_i32_0 = arith.constant 0 : i32
    %c0_i32_1 = arith.constant 0 : i32
    return %c0_i32, %c0_i32_0 : i32, i32
  }
  func.func @transform_3(%arg0: i32) -> (i32, i32) {
    %c0_i32 = arith.constant 0 : i32
    %c0_i32_0 = arith.constant 0 : i32
    %c0_i32_1 = arith.constant 0 : i32
    return %c0_i32, %c0_i32_0 : i32, i32
  }
  func.func @transform_4(%arg0: i32) -> i32 {
    %c0_i32 = arith.constant 0 : i32
    %c0_i32_0 = arith.constant 0 : i32
    return %c0_i32 : i32
  }
  func.func @transform_5(%arg0: i32) -> (i32, i32) {
    %c0_i32 = arith.constant 0 : i32
    %c0_i32_0 = arith.constant 0 : i32
    return %c0_i32, %arg0 : i32, i32
  }
}

module attributes {stable_mosaic.version = 11 : i64} {
  func.func @kernel(%arg0: i32, %arg1: memref<20x128xbf16, #tpu.memory_space<vmem>>, %arg2: memref<32x20xbf16, #tpu.memory_space<vmem>>, %arg3: memref<32x32xbf16, #tpu.memory_space<vmem>>, %arg4: memref<96x1xf32, #tpu.memory_space<vmem>>, %arg5: memref<3xf32, #tpu.memory_space<smem>>, %arg6: memref<1x128xf32, #tpu.memory_space<vmem>>) attributes {dimension_semantics = [#tpu.dimension_semantics<parallel>], iteration_bounds = array<i64: 1>, scalar_prefetch = 0 : i64, scratch_operands = 0 : i64, tpu.core_type = #tpu.core_type<tc>, window_params = [{transform_indices = @transform_0, window_bounds = array<i64: 20, 128>}, {pipeline_mode = #tpu.pipeline_mode<synchronous>, transform_indices = @transform_1, window_bounds = array<i64: 32, 20>}, {pipeline_mode = #tpu.pipeline_mode<synchronous>, transform_indices = @transform_2, window_bounds = array<i64: 32, 32>}, {pipeline_mode = #tpu.pipeline_mode<synchronous>, transform_indices = @transform_3, window_bounds = array<i64: 96, 1>}, {transform_indices = @transform_4, window_bounds = array<i64: 3>}, {transform_indices = @transform_5, window_bounds = array<i64: 1, 128>}]} {
    %c0 = arith.constant 0 : index
    %c0_0 = arith.constant 0 : index
    %0 = vector.load %arg1[%c0, %c0_0] : memref<20x128xbf16, #tpu.memory_space<vmem>>, vector<20x128xbf16>
    %c0_1 = arith.constant 0 : index
    %c0_2 = arith.constant 0 : index
    %1 = vector.load %arg2[%c0_1, %c0_2] : memref<32x20xbf16, #tpu.memory_space<vmem>>, vector<32x20xbf16>
    %c0_3 = arith.constant 0 : index
    %c0_4 = arith.constant 0 : index
    %2 = vector.load %arg4[%c0_3, %c0_4] : memref<96x1xf32, #tpu.memory_space<vmem>>, vector<32x1xf32>
    %cst = arith.constant dense<0.000000e+00> : vector<32x128xf32>
    %3 = tpu.matmul %1, %0, %cst {dimension_numbers = #tpu.dot_dimension_numbers<[1], [0], [0], [1], [0, 0, 1, 1], [], []>} : vector<32x20xbf16>, vector<20x128xbf16>, vector<32x128xf32> -> vector<32x128xf32>
    %4 = vector.broadcast %2 : vector<32x1xf32> to vector<32x128xf32>
    %5 = arith.addf %3, %4 : vector<32x128xf32>
    %cst_5 = arith.constant 0.00999999977 : f32
    %6 = vector.broadcast %cst_5 : f32 to vector<32x128xf32>
    %7 = arith.mulf %6, %5 : vector<32x128xf32>
    %8 = arith.maximumf %5, %7 : vector<32x128xf32>
    %9 = arith.truncf %8 : vector<32x128xf32> to vector<32x128xbf16>
    %c0_6 = arith.constant 0 : index
    %c0_7 = arith.constant 0 : index
    %10 = vector.load %arg3[%c0_6, %c0_7] : memref<32x32xbf16, #tpu.memory_space<vmem>>, vector<32x32xbf16>
    %c32 = arith.constant 32 : index
    %c0_8 = arith.constant 0 : index
    %11 = vector.load %arg4[%c32, %c0_8] : memref<96x1xf32, #tpu.memory_space<vmem>>, vector<32x1xf32>
    %cst_9 = arith.constant dense<0.000000e+00> : vector<32x128xf32>
    %12 = tpu.matmul %10, %9, %cst_9 {dimension_numbers = #tpu.dot_dimension_numbers<[1], [0], [0], [1], [0, 0, 1, 1], [], []>} : vector<32x32xbf16>, vector<32x128xbf16>, vector<32x128xf32> -> vector<32x128xf32>
    %13 = vector.broadcast %11 : vector<32x1xf32> to vector<32x128xf32>
    %14 = arith.addf %12, %13 : vector<32x128xf32>
    %cst_10 = arith.constant 0.00999999977 : f32
    %15 = vector.broadcast %cst_10 : f32 to vector<32x128xf32>
    %16 = arith.mulf %15, %14 : vector<32x128xf32>
    %17 = arith.maximumf %14, %16 : vector<32x128xf32>
    %c64 = arith.constant 64 : index
    %c0_11 = arith.constant 0 : index
    %18 = vector.load %arg4[%c64, %c0_11] : memref<96x1xf32, #tpu.memory_space<vmem>>, vector<32x1xf32>
    %19 = vector.broadcast %18 : vector<32x1xf32> to vector<32x128xf32>
    %20 = arith.mulf %17, %19 : vector<32x128xf32>
    %cst_12 = arith.constant dense<0.000000e+00> : vector<128xf32>
    %21 = vector.multi_reduction <add>, %20, %cst_12 [0] : vector<32x128xf32> to vector<128xf32>
    %22 = vector.shape_cast %21 : vector<128xf32> to vector<1x128xf32>
    %c0_13 = arith.constant 0 : index
    %23 = memref.load %arg5[%c0_13] : memref<3xf32, #tpu.memory_space<smem>>
    %24 = vector.broadcast %23 : f32 to vector<1x128xf32>
    %25 = arith.addf %22, %24 : vector<1x128xf32>
    %cst_14 = arith.constant 0.00999999977 : f32
    %26 = vector.broadcast %cst_14 : f32 to vector<1x128xf32>
    %27 = arith.mulf %26, %25 : vector<1x128xf32>
    %28 = arith.maximumf %25, %27 : vector<1x128xf32>
    %c1 = arith.constant 1 : index
    %29 = memref.load %arg5[%c1] : memref<3xf32, #tpu.memory_space<smem>>
    %30 = vector.broadcast %29 : f32 to vector<1x128xf32>
    %31 = arith.mulf %28, %30 : vector<1x128xf32>
    %c2 = arith.constant 2 : index
    %32 = memref.load %arg5[%c2] : memref<3xf32, #tpu.memory_space<smem>>
    %33 = vector.broadcast %32 : f32 to vector<1x128xf32>
    %34 = arith.addf %31, %33 : vector<1x128xf32>
    %c0_15 = arith.constant 0 : index
    %c0_16 = arith.constant 0 : index
    %35 = vector.load %arg6[%c0_15, %c0_16] : memref<1x128xf32, #tpu.memory_space<vmem>>, vector<1x128xf32>
    tpu.vector_store %arg6[%c0_15, %c0_16], %34 {strides = array<i32>} : memref<1x128xf32, #tpu.memory_space<vmem>>, vector<1x128xf32>,
    return
  }
  func.func @transform_0(%arg0: i32) -> (i32, i32) {
    %c0_i32 = arith.constant 0 : i32
    %c0_i32_0 = arith.constant 0 : i32
    return %c0_i32, %arg0 : i32, i32
  }
  func.func @transform_1(%arg0: i32) -> (i32, i32) {
    %c0_i32 = arith.constant 0 : i32
    %c0_i32_0 = arith.constant 0 : i32
    %c0_i32_1 = arith.constant 0 : i32
    return %c0_i32, %c0_i32_0 : i32, i32
  }
  func.func @transform_2(%arg0: i32) -> (i32, i32) {
    %c0_i32 = arith.constant 0 : i32
    %c0_i32_0 = arith.constant 0 : i32
    %c0_i32_1 = arith.constant 0 : i32
    return %c0_i32, %c0_i32_0 : i32, i32
  }
  func.func @transform_3(%arg0: i32) -> (i32, i32) {
    %c0_i32 = arith.constant 0 : i32
    %c0_i32_0 = arith.constant 0 : i32
    %c0_i32_1 = arith.constant 0 : i32
    return %c0_i32, %c0_i32_0 : i32, i32
  }
  func.func @transform_4(%arg0: i32) -> i32 {
    %c0_i32 = arith.constant 0 : i32
    %c0_i32_0 = arith.constant 0 : i32
    return %c0_i32 : i32
  }
  func.func @transform_5(%arg0: i32) -> (i32, i32) {
    %c0_i32 = arith.constant 0 : i32
    %c0_i32_0 = arith.constant 0 : i32
    return %c0_i32, %arg0 : i32, i32
  }
}

</mosaic_0001>

<llo_original>
// kernel: tpu_custom_call.1
$region0: #{tpu_custom_call.1}
  #allocation0 [shape = 'u32[]', space=smem, size = 0x4, offset = 0x4, fixed_abs, tag = 'smem constant byte address 0x4 - core index']
  #allocation1 [shape = 'u32[144,128]{1,0:T(1,128)}', space=vmem, size = 0x12000, scoped, tag = 'internal scratch']
  %s0 = inlined_call_operand.vmem [shape: f32[128,20], index: 0, kind: input, shape index: {}]
  %s1 = inlined_call_operand.vmem [shape: bf16[32,20], index: 1, kind: input, shape index: {}]
  %s2 = inlined_call_operand.vmem [shape: bf16[32,32], index: 2, kind: input, shape index: {}]
  %s3 = inlined_call_operand.vmem [shape: f32[96,1], index: 3, kind: input, shape index: {}]
  %s4 = inlined_call_operand.vmem [shape: f32[3], index: 4, kind: input, shape index: {}]
  %s5 = inlined_call_operand.hbm [shape: f32[1,128], index: 5, kind: output, shape index: {}]
  %s6 = sld [smem:[#allocation0]]
  $region34: #{tpu_custom_call.1} parent=0
    _
  %s8 = ssub.s32 1, %s6
  %s9 = scalar_select 0, %s8, %s6
  $region1: #{tpu_custom_call.1} parent=0
    #allocation2 [shape = 'u8[512]{0}', space=smem, size = 0x200, scoped, tag = 'input window, operand 4, single buffered']
    #allocation3 [shape = 's32[1]{0}', space=sflag, size = 0x4, scoped, tag = 'scoped memory for tpu_custom_call.1']
    #allocation4 [shape = 's32[1]{0}', space=sflag, size = 0x4, scoped, tag = 'scoped memory for tpu_custom_call.1']
    #allocation5 [shape = 'u8[512]{0}', space=vmem, size = 0x400, scoped, tag = 'output window, operand 0, single buffered']
    %10 = vsyncpa [#allocation4], 0
    %11 = vsyncpa [#allocation3], 0
    // Predicated region
    $region2: #{tpu_custom_call.1} parent=1 // pred_check
      _
    $region3: #{tpu_custom_call.1} parent=1 // pred_check_branch
      %13 = sbr.rel (0) target = $region5
    $region4: #{tpu_custom_call.1} parent=1 // pred_region
      _
    $region5: #{tpu_custom_call.1} parent=1 // pred_fallthru
      _
    // Predicated region
    $region6: #{tpu_custom_call.1} parent=1 // pred_check
      _
    $region7: #{tpu_custom_call.1} parent=1 // pred_check_branch
      %15 = sbr.rel (0) target = $region9
    $region8: #{tpu_custom_call.1} parent=1 // pred_region
      _
    $region9: #{tpu_custom_call.1} parent=1 // pred_fallthru
      _
    // Predicated region
    $region10: #{tpu_custom_call.1} parent=1 // pred_check
      _
    $region11: #{tpu_custom_call.1} parent=1 // pred_check_branch
      %17 = sbr.rel (0) target = $region13
    $region12: #{tpu_custom_call.1} parent=1 // pred_region
      _
    $region13: #{tpu_custom_call.1} parent=1 // pred_fallthru
      _
    // Predicated region
    $region14: #{tpu_custom_call.1} parent=1 // pred_check
      _
    $region15: #{tpu_custom_call.1} parent=1 // pred_check_branch
      %19 = sbr.rel (0) target = $region17
    $region16: #{tpu_custom_call.1} parent=1 // pred_region
      _
    $region17: #{tpu_custom_call.1} parent=1 // pred_fallthru
      _
    // Predicated region
    $region18: #{tpu_custom_call.1} parent=1 // pred_check
      _
    $region19: #{tpu_custom_call.1} parent=1 // pred_check_branch
      %21 = sbr.rel (0) target = $region21
    $region20: #{tpu_custom_call.1} parent=1 // pred_region
      %s23 = ssub.s32 16, 16
      %24 = vsyncadd [#allocation4], %s23
      %s26 = sshll.u32 %s4, 4
      %s27 = int_to_ptr.vmem [resolvable:$true] %s26
      %29 = dma.vmem_to_smem %s27, 16, [#allocation2], [#allocation4]
    $region21: #{tpu_custom_call.1} parent=1 // pred_fallthru
      _
    // Predicated region
    $region22: #{tpu_custom_call.1} parent=1 // pred_check
      _
    $region23: #{tpu_custom_call.1} parent=1 // pred_check_branch
      %31 = sbr.rel (0) target = $region25
    $region24: #{tpu_custom_call.1} parent=1 // pred_region
      %32 = dma.done [#allocation4], 16
    $region25: #{tpu_custom_call.1} parent=1 // pred_fallthru
      _
    %33 = sfence
    %v35 = vld [vmem:[%s0] sm:$0xff]
    %v36 = vld [vmem:[%s0 + $0x8] sm:$0xff]
    %v37 = vld [vmem:[%s0 + $0x10] sm:$0xff]
    %v38 = vld [vmem:[%s0 + $0x18] sm:$0xff]
    %v39 = vld [vmem:[%s0 + $0x20] sm:$0xff]
    %v40 = vld [vmem:[%s0 + $0x28] sm:$0xff]
    %v41 = vld [vmem:[%s0 + $0x30] sm:$0xff]
    %v42 = vld [vmem:[%s0 + $0x38] sm:$0xff]
    %v43 = vld [vmem:[%s0 + $0x40] sm:$0xff]
    %v44 = vld [vmem:[%s0 + $0x48] sm:$0xff]
    %v45 = vld [vmem:[%s0 + $0x50] sm:$0xff]
    %v46 = vld [vmem:[%s0 + $0x58] sm:$0xff]
    %v47 = vld [vmem:[%s0 + $0x60] sm:$0xff]
    %v48 = vld [vmem:[%s0 + $0x68] sm:$0xff]
    %v49 = vld [vmem:[%s0 + $0x70] sm:$0xff]
    %v50 = vld [vmem:[%s0 + $0x78] sm:$0xff]
    %v51 = vpack.c.bf16 %v36, %v35
    %v52 = vpack.c.bf16 %v38, %v37
    %v53 = vpack.c.bf16 %v40, %v39
    %v54 = vpack.c.bf16 %v42, %v41
    %v55 = vpack.c.bf16 %v44, %v43
    %v56 = vpack.c.bf16 %v46, %v45
    %v57 = vpack.c.bf16 %v48, %v47
    %v58 = vpack.c.bf16 %v50, %v49
    %v59 = vld [vmem:[%s1] sm:$0xf]
    %v60 = vld [vmem:[%s1 + $0x4] sm:$0xf]
    %v61 = vld [vmem:[%s1 + $0x8] sm:$0xf]
    %v62 = vld [vmem:[%s1 + $0xc] sm:$0xf]
    %v63 = vld [vmem:[%s3] sm:$0xff]
    %v64 = vld [vmem:[%s3 + $0x8] sm:$0xff]
    %v65 = vld [vmem:[%s3 + $0x10] sm:$0xff]
    %v66 = vld [vmem:[%s3 + $0x18] sm:$0xff]
    %68 = vset.pattern.permute.xlu0 0
    %69 = vperm.xlu0 %68, %v63
    %v70 = vpop.permute.xlu0 %69
    %73 = vset.pattern.permute.xlu0 0
    %74 = vperm.xlu0 %73, %v64
    %v75 = vpop.permute.xlu0 %74
    %78 = vset.pattern.permute.xlu0 0
    %79 = vperm.xlu0 %78, %v65
    %v80 = vpop.permute.xlu0 %79
    %83 = vset.pattern.permute.xlu0 0
    %84 = vperm.xlu0 %83, %v66
    %v85 = vpop.permute.xlu0 %84
    %v91 = vunpack.c.l.b16 %v59
    %v92 = vunpack.c.l.b16 %v60
    %v93 = vunpack.c.l.b16 %v61
    %v94 = vunpack.c.l.b16 %v62
    %v95 = vpack.c.b16 %v92, %v91
    %v96 = vpack.c.b16 %v94, %v93
    %vm97 = vcmask 162816
    %v99 = vsel %vm97, %v95, 0
    %v102 = vsel %vm97, %v96, 0
    %v105 = vsel %vm97, %v51, 0
    %v108 = vsel %vm97, %v52, 0
    %v111 = vsel %vm97, %v53, 0
    %v114 = vsel %vm97, %v54, 0
    %v117 = vsel %vm97, %v55, 0
    %v120 = vsel %vm97, %v56, 0
    %v123 = vsel %vm97, %v57, 0
    %v126 = vsel %vm97, %v58, 0
    %128 = vmatprep.subr.bf16.mxu0 0
    %129 = vmatpush1.bf16.xpose.msra.mxu0 %v105
    %130 = vmatprep.subr.bf16.mxu0 0
    %131 = vmatpush1.bf16.xpose.msra.mxu0 %v108
    %132 = vmatprep.subr.bf16.mxu0 0
    %133 = vmatpush1.bf16.xpose.msra.mxu0 %v111
    %134 = vmatprep.subr.bf16.mxu0 0
    %135 = vmatpush1.bf16.xpose.msra.mxu0 %v114
    %136 = vmatprep.subr.bf16.mxu0 0
    %137 = vmatpush1.bf16.xpose.msra.mxu0 %v117
    %138 = vmatprep.subr.bf16.mxu0 0
    %139 = vmatpush1.bf16.xpose.msra.mxu0 %v120
    %140 = vmatprep.subr.bf16.mxu0 0
    %141 = vmatpush1.bf16.xpose.msra.mxu0 %v123
    %142 = vmatprep.subr.bf16.mxu0 0
    %143 = vmatpush1.bf16.xpose.msra.mxu0 %v126
    %144 = vmatprep.subr.bf16.mxu0 0
    %145 = vmatpush1.bf16.xpose.msra.mxu0 0
    %146 = vmatprep.subr.bf16.mxu0 0
    %147 = vmatpush1.bf16.xpose.msra.mxu0 0
    %148 = vmatprep.subr.bf16.mxu0 0
    %149 = vmatpush1.bf16.xpose.msra.mxu0 0
    %150 = vmatprep.subr.bf16.mxu0 0
    %151 = vmatpush1.bf16.xpose.msra.mxu0 0
    %152 = vmatprep.subr.bf16.mxu0 0
    %153 = vmatpush1.bf16.xpose.msra.mxu0 0
    %154 = vmatprep.subr.bf16.mxu0 0
    %155 = vmatpush1.bf16.xpose.msra.mxu0 0
    %156 = vmatprep.subr.bf16.mxu0 0
    %157 = vmatpush1.bf16.xpose.msra.mxu0 0
    %158 = vmatprep.subr.bf16.mxu0 0
    %159 = vmatpush1.bf16.xpose.msra.mxu0 0
    %160 = vmatprep.mubr.bf16.mxu0 0
    %161 = vmatmul.mubr.bf16.gmra.mrb[0].mxu0 %v99
    %v162 = vpop.f32.mrb[0].mxu0
    %v163 = vadd.f32 %v70, %v162
    %v164 = vpop.f32.mrb[0].mxu0
    %v165 = vpop.f32.mrb[0].mxu0
    %v166 = vadd.f32 %v75, %v165
    %v167 = vpop.f32.mrb[0].mxu0
    %168 = vmatprep.mubr.bf16.mxu0 0
    %169 = vmatmul.mubr.bf16.gmra.mrb[0].mxu0 %v102
    %v170 = vpop.f32.mrb[0].mxu0
    %v171 = vadd.f32 %v80, %v170
    %v172 = vpop.f32.mrb[0].mxu0
    %v173 = vpop.f32.mrb[0].mxu0
    %v174 = vadd.f32 %v85, %v173
    %v175 = vpop.f32.mrb[0].mxu0
    %176 = vdwg.mxu0
    %v177 = vmul.f32 %v163, 0.01
    %v178 = vmul.f32 %v166, 0.01
    %v179 = vmul.f32 %v171, 0.01
    %v180 = vmul.f32 %v174, 0.01
    %v181 = vmax.f32 %v163, %v177
    %v182 = vmax.f32 %v166, %v178
    %v183 = vmax.f32 %v171, %v179
    %v184 = vmax.f32 %v174, %v180
    %v185 = vpack.c.bf16 %v182, %v181
    %v186 = vpack.c.bf16 %v184, %v183
    %v187 = vld [vmem:[%s2] sm:$0xf]
    %v188 = vld [vmem:[%s2 + $0x4] sm:$0xf]
    %v189 = vld [vmem:[%s2 + $0x8] sm:$0xf]
    %v190 = vld [vmem:[%s2 + $0xc] sm:$0xf]
    %v191 = vld [vmem:[%s3 + $0x20] sm:$0xff]
    %v192 = vld [vmem:[%s3 + $0x28] sm:$0xff]
    %v193 = vld [vmem:[%s3 + $0x30] sm:$0xff]
    %v194 = vld [vmem:[%s3 + $0x38] sm:$0xff]
    %196 = vset.pattern.permute.xlu0 0
    %197 = vperm.xlu0 %196, %v191
    %v198 = vpop.permute.xlu0 %197
    %201 = vset.pattern.permute.xlu0 0
    %202 = vperm.xlu0 %201, %v192
    %v203 = vpop.permute.xlu0 %202
    %206 = vset.pattern.permute.xlu0 0
    %207 = vperm.xlu0 %206, %v193
    %v208 = vpop.permute.xlu0 %207
    %211 = vset.pattern.permute.xlu0 0
    %212 = vperm.xlu0 %211, %v194
    %v213 = vpop.permute.xlu0 %212
    %v219 = vunpack.c.l.b16 %v187
    %v220 = vunpack.c.l.b16 %v188
    %v221 = vunpack.c.l.b16 %v189
    %v222 = vunpack.c.l.b16 %v190
    %v223 = vpack.c.b16 %v220, %v219
    %v224 = vpack.c.b16 %v222, %v221
    %vm225 = vcmask 261120
    %v227 = vsel %vm225, %v223, 0
    %v230 = vsel %vm225, %v224, 0
    %232 = vmatprep.subr.bf16.mxu0 0
    %233 = vmatpush1.bf16.msra.mxu0 %v185
    %234 = vmatprep.subr.bf16.mxu0 0
    %235 = vmatpush1.bf16.msra.mxu0 %v186
    %236 = vmatprep.subr.bf16.mxu0 0
    %237 = vmatpush1.bf16.msra.mxu0 0
    %238 = vmatprep.subr.bf16.mxu0 0
    %239 = vmatpush1.bf16.msra.mxu0 0
    %240 = vmatprep.subr.bf16.mxu0 0
    %241 = vmatpush1.bf16.msra.mxu0 0
    %242 = vmatprep.subr.bf16.mxu0 0
    %243 = vmatpush1.bf16.msra.mxu0 0
    %244 = vmatprep.subr.bf16.mxu0 0
    %245 = vmatpush1.bf16.msra.mxu0 0
    %246 = vmatprep.subr.bf16.mxu0 0
    %247 = vmatpush1.bf16.msra.mxu0 0
    %248 = vmatprep.subr.bf16.mxu0 0
    %249 = vmatpush1.bf16.msra.mxu0 0
    %250 = vmatprep.subr.bf16.mxu0 0
    %251 = vmatpush1.bf16.msra.mxu0 0
    %252 = vmatprep.subr.bf16.mxu0 0
    %253 = vmatpush1.bf16.msra.mxu0 0
    %254 = vmatprep.subr.bf16.mxu0 0
    %255 = vmatpush1.bf16.msra.mxu0 0
    %256 = vmatprep.subr.bf16.mxu0 0
    %257 = vmatpush1.bf16.msra.mxu0 0
    %258 = vmatprep.subr.bf16.mxu0 0
    %259 = vmatpush1.bf16.msra.mxu0 0
    %260 = vmatprep.subr.bf16.mxu0 0
    %261 = vmatpush1.bf16.msra.mxu0 0
    %262 = vmatprep.subr.bf16.mxu0 0
    %263 = vmatpush1.bf16.msra.mxu0 0
    %264 = vmatprep.mubr.bf16.mxu0 0
    %265 = vmatmul.mubr.bf16.gmra.mrb[0].mxu0 %v227
    %v266 = vpop.f32.mrb[0].mxu0
    %v267 = vadd.f32 %v198, %v266
    %v268 = vpop.f32.mrb[0].mxu0
    %v269 = vpop.f32.mrb[0].mxu0
    %v270 = vadd.f32 %v203, %v269
    %v271 = vpop.f32.mrb[0].mxu0
    %272 = vmatprep.mubr.bf16.mxu0 0
    %273 = vmatmul.mubr.bf16.gmra.mrb[0].mxu0 %v230
    %v274 = vpop.f32.mrb[0].mxu0
    %v275 = vadd.f32 %v208, %v274
    %v276 = vpop.f32.mrb[0].mxu0
    %v277 = vpop.f32.mrb[0].mxu0
    %v278 = vadd.f32 %v213, %v277
    %v279 = vpop.f32.mrb[0].mxu0
    %280 = vdwg.mxu0
    %v281 = vmul.f32 %v267, 0.01
    %v282 = vmul.f32 %v270, 0.01
    %v283 = vmul.f32 %v275, 0.01
    %v284 = vmul.f32 %v278, 0.01
    %v285 = vmax.f32 %v267, %v281
    %v286 = vmax.f32 %v270, %v282
    %v287 = vmax.f32 %v275, %v283
    %v288 = vmax.f32 %v278, %v284
    %v289 = vld [vmem:[%s3 + $0x40] sm:$0xff]
    %v290 = vld [vmem:[%s3 + $0x48] sm:$0xff]
    %v291 = vld [vmem:[%s3 + $0x50] sm:$0xff]
    %v292 = vld [vmem:[%s3 + $0x58] sm:$0xff]
    %294 = vset.pattern.permute.xlu0 0
    %295 = vperm.xlu0 %294, %v289
    %v296 = vpop.permute.xlu0 %295
    %299 = vset.pattern.permute.xlu0 0
    %300 = vperm.xlu0 %299, %v290
    %v301 = vpop.permute.xlu0 %300
    %304 = vset.pattern.permute.xlu0 0
    %305 = vperm.xlu0 %304, %v291
    %v306 = vpop.permute.xlu0 %305
    %309 = vset.pattern.permute.xlu0 0
    %310 = vperm.xlu0 %309, %v292
    %v311 = vpop.permute.xlu0 %310
    %v313 = vmul.f32 %v285, %v296
    %v314 = vmul.f32 %v286, %v301
    %v315 = vmul.f32 %v287, %v306
    %v316 = vmul.f32 %v288, %v311
    %v317 = vadd.f32 %v313, %v314
    %v318 = vadd.f32 %v317, %v315
    %v319 = vadd.f32 %v318, %v316
    %v320 = vrot.slane %v319, 4
    %v321 = vadd.f32 %v319, %v320
    %v322 = vrot.slane %v321, 2
    %v323 = vadd.f32 %v321, %v322
    %v324 = vrot.slane %v323, 1
    %v325 = vadd.f32 %v323, %v324
    %s326 = sld [smem:[#allocation2]]
    %v327 = vstv %s326
    %v328 = vadd.f32 %v325, %v327
    %v329 = vmul.f32 %v328, 0.01
    %v330 = vmax.f32 %v328, %v329
    %s331 = sld [smem:[#allocation2 + $0x1]]
    %v332 = vstv %s331
    %v333 = vmul.f32 %v330, %v332
    %s334 = sld [smem:[#allocation2 + $0x2]]
    %v335 = vstv %s334
    %v336 = vadd.f32 %v333, %v335
    %337 = vst [vmem:[#allocation5] sm:$0x1] %v336
    // Predicated region
    $region26: #{tpu_custom_call.1} parent=1 // pred_check
      _
    $region27: #{tpu_custom_call.1} parent=1 // pred_check_branch
      %339 = sbr.rel (0) target = $region29
    $region28: #{tpu_custom_call.1} parent=1 // pred_region
      %s341 = ssub.s32 16, 16
      %342 = vsyncadd [#allocation3], %s341
      %s344 = sshll.u32 [#allocation5], 4
      %s345 = int_to_ptr.vmem [resolvable:$true] %s344
      %347 = dma.vmem_to_hbm [thread:$0]  %s345, 16, %s5, [#allocation3]
    $region29: #{tpu_custom_call.1} parent=1 // pred_fallthru
      _
    // Predicated region
    $region30: #{tpu_custom_call.1} parent=1 // pred_check
      _
    $region31: #{tpu_custom_call.1} parent=1 // pred_check_branch
      %349 = sbr.rel (0) target = $region33
    $region32: #{tpu_custom_call.1} parent=1 // pred_region
      %350 = dma.done [#allocation3], 16
    $region33: #{tpu_custom_call.1} parent=1 // pred_fallthru
      _
    %351 = vsyncpa [#allocation3], 1
    %352 = vsyncpa [#allocation4], 1

// kernel: tpu_custom_call.1
$region0: #{tpu_custom_call.1}
  #allocation0 [shape = 'u32[]', space=smem, size = 0x4, offset = 0x4, fixed_abs, tag = 'smem constant byte address 0x4 - core index']
  #allocation1 [shape = 'u32[144,128]{1,0:T(1,128)}', space=vmem, size = 0x12000, scoped, tag = 'internal scratch']
  %s0 = inlined_call_operand.vmem [shape: bf16[20,128], index: 0, kind: input, shape index: {}]
  %s1 = inlined_call_operand.vmem [shape: bf16[32,20], index: 1, kind: input, shape index: {}]
  %s2 = inlined_call_operand.vmem [shape: bf16[32,32], index: 2, kind: input, shape index: {}]
  %s3 = inlined_call_operand.vmem [shape: f32[96,1], index: 3, kind: input, shape index: {}]
  %s4 = inlined_call_operand.vmem [shape: f32[3], index: 4, kind: input, shape index: {}]
  %s5 = inlined_call_operand.hbm [shape: f32[1,128], index: 5, kind: output, shape index: {}]
  %s6 = sld [smem:[#allocation0]]
  $region34: #{tpu_custom_call.1} parent=0
    _
  %s8 = ssub.s32 1, %s6
  %s9 = scalar_select 0, %s8, %s6
  $region1: #{tpu_custom_call.1} parent=0
    #allocation2 [shape = 'u8[512]{0}', space=smem, size = 0x200, scoped, tag = 'input window, operand 4, single buffered']
    #allocation3 [shape = 's32[1]{0}', space=sflag, size = 0x4, scoped, tag = 'scoped memory for tpu_custom_call.1']
    #allocation4 [shape = 's32[1]{0}', space=sflag, size = 0x4, scoped, tag = 'scoped memory for tpu_custom_call.1']
    #allocation5 [shape = 'u8[512]{0}', space=vmem, size = 0x400, scoped, tag = 'output window, operand 0, single buffered']
    %10 = vsyncpa [#allocation4], 0
    %11 = vsyncpa [#allocation3], 0
    // Predicated region
    $region2: #{tpu_custom_call.1} parent=1 // pred_check
      _
    $region3: #{tpu_custom_call.1} parent=1 // pred_check_branch
      %13 = sbr.rel (0) target = $region5
    $region4: #{tpu_custom_call.1} parent=1 // pred_region
      _
    $region5: #{tpu_custom_call.1} parent=1 // pred_fallthru
      _
    // Predicated region
    $region6: #{tpu_custom_call.1} parent=1 // pred_check
      _
    $region7: #{tpu_custom_call.1} parent=1 // pred_check_branch
      %15 = sbr.rel (0) target = $region9
    $region8: #{tpu_custom_call.1} parent=1 // pred_region
      _
    $region9: #{tpu_custom_call.1} parent=1 // pred_fallthru
      _
    // Predicated region
    $region10: #{tpu_custom_call.1} parent=1 // pred_check
      _
    $region11: #{tpu_custom_call.1} parent=1 // pred_check_branch
      %17 = sbr.rel (0) target = $region13
    $region12: #{tpu_custom_call.1} parent=1 // pred_region
      _
    $region13: #{tpu_custom_call.1} parent=1 // pred_fallthru
      _
    // Predicated region
    $region14: #{tpu_custom_call.1} parent=1 // pred_check
      _
    $region15: #{tpu_custom_call.1} parent=1 // pred_check_branch
      %19 = sbr.rel (0) target = $region17
    $region16: #{tpu_custom_call.1} parent=1 // pred_region
      _
    $region17: #{tpu_custom_call.1} parent=1 // pred_fallthru
      _
    // Predicated region
    $region18: #{tpu_custom_call.1} parent=1 // pred_check
      _
    $region19: #{tpu_custom_call.1} parent=1 // pred_check_branch
      %21 = sbr.rel (0) target = $region21
    $region20: #{tpu_custom_call.1} parent=1 // pred_region
      %s23 = ssub.s32 16, 16
      %24 = vsyncadd [#allocation4], %s23
      %s26 = sshll.u32 %s4, 4
      %s27 = int_to_ptr.vmem [resolvable:$true] %s26
      %29 = dma.vmem_to_smem %s27, 16, [#allocation2], [#allocation4]
    $region21: #{tpu_custom_call.1} parent=1 // pred_fallthru
      _
    // Predicated region
    $region22: #{tpu_custom_call.1} parent=1 // pred_check
      _
    $region23: #{tpu_custom_call.1} parent=1 // pred_check_branch
      %31 = sbr.rel (0) target = $region25
    $region24: #{tpu_custom_call.1} parent=1 // pred_region
      %32 = dma.done [#allocation4], 16
    $region25: #{tpu_custom_call.1} parent=1 // pred_fallthru
      _
    %33 = sfence
    %v35 = vld [vmem:[%s0] sm:$0xf]
    %v36 = vld [vmem:[%s0 + $0x4] sm:$0xf]
    %v37 = vld [vmem:[%s0 + $0x8] sm:$0x3]
    %v38 = vld [vmem:[%s1] sm:$0xf]
    %v39 = vld [vmem:[%s1 + $0x4] sm:$0xf]
    %v40 = vld [vmem:[%s1 + $0x8] sm:$0xf]
    %v41 = vld [vmem:[%s1 + $0xc] sm:$0xf]
    %v42 = vld [vmem:[%s3] sm:$0xff]
    %v43 = vld [vmem:[%s3 + $0x8] sm:$0xff]
    %v44 = vld [vmem:[%s3 + $0x10] sm:$0xff]
    %v45 = vld [vmem:[%s3 + $0x18] sm:$0xff]
    %47 = vset.pattern.permute.xlu0 0
    %48 = vperm.xlu0 %47, %v42
    %v49 = vpop.permute.xlu0 %48
    %52 = vset.pattern.permute.xlu0 0
    %53 = vperm.xlu0 %52, %v43
    %v54 = vpop.permute.xlu0 %53
    %57 = vset.pattern.permute.xlu0 0
    %58 = vperm.xlu0 %57, %v44
    %v59 = vpop.permute.xlu0 %58
    %62 = vset.pattern.permute.xlu0 0
    %63 = vperm.xlu0 %62, %v45
    %v64 = vpop.permute.xlu0 %63
    %v70 = vunpack.c.l.b16 %v38
    %v71 = vunpack.c.l.b16 %v39
    %v72 = vunpack.c.l.b16 %v40
    %v73 = vunpack.c.l.b16 %v41
    %v74 = vpack.c.b16 %v71, %v70
    %v75 = vpack.c.b16 %v73, %v72
    %v79 = vunpack.c.l.b16 %v35
    %v80 = vunpack.c.l.b16 %v36
    %v81 = vunpack.c.l.b16 %v37
    %v82 = vpack.c.b16 %v80, %v79
    %v83 = vpack.c.b16 %v81, %v81
    %vm85 = vcmask 162816
    %v87 = vsel %vm85, %v74, 0
    %v90 = vsel %vm85, %v75, 0
    %vm92 = vcmask 1041408
    %v94 = vsel %vm92, %v83, 0
    %96 = vmatprep.subr.bf16.mxu0 0
    %97 = vmatpush1.bf16.msra.mxu0 %v82
    %98 = vmatprep.subr.bf16.mxu0 0
    %99 = vmatpush1.bf16.msra.mxu0 %v94
    %100 = vmatprep.subr.bf16.mxu0 0
    %101 = vmatpush1.bf16.msra.mxu0 0
    %102 = vmatprep.subr.bf16.mxu0 0
    %103 = vmatpush1.bf16.msra.mxu0 0
    %104 = vmatprep.subr.bf16.mxu0 0
    %105 = vmatpush1.bf16.msra.mxu0 0
    %106 = vmatprep.subr.bf16.mxu0 0
    %107 = vmatpush1.bf16.msra.mxu0 0
    %108 = vmatprep.subr.bf16.mxu0 0
    %109 = vmatpush1.bf16.msra.mxu0 0
    %110 = vmatprep.subr.bf16.mxu0 0
    %111 = vmatpush1.bf16.msra.mxu0 0
    %112 = vmatprep.subr.bf16.mxu0 0
    %113 = vmatpush1.bf16.msra.mxu0 0
    %114 = vmatprep.subr.bf16.mxu0 0
    %115 = vmatpush1.bf16.msra.mxu0 0
    %116 = vmatprep.subr.bf16.mxu0 0
    %117 = vmatpush1.bf16.msra.mxu0 0
    %118 = vmatprep.subr.bf16.mxu0 0
    %119 = vmatpush1.bf16.msra.mxu0 0
    %120 = vmatprep.subr.bf16.mxu0 0
    %121 = vmatpush1.bf16.msra.mxu0 0
    %122 = vmatprep.subr.bf16.mxu0 0
    %123 = vmatpush1.bf16.msra.mxu0 0
    %124 = vmatprep.subr.bf16.mxu0 0
    %125 = vmatpush1.bf16.msra.mxu0 0
    %126 = vmatprep.subr.bf16.mxu0 0
    %127 = vmatpush1.bf16.msra.mxu0 0
    %128 = vmatprep.mubr.bf16.mxu0 0
    %129 = vmatmul.mubr.bf16.gmra.mrb[0].mxu0 %v87
    %v130 = vpop.f32.mrb[0].mxu0
    %v131 = vadd.f32 %v49, %v130
    %v132 = vpop.f32.mrb[0].mxu0
    %v133 = vpop.f32.mrb[0].mxu0
    %v134 = vadd.f32 %v54, %v133
    %v135 = vpop.f32.mrb[0].mxu0
    %136 = vmatprep.mubr.bf16.mxu0 0
    %137 = vmatmul.mubr.bf16.gmra.mrb[0].mxu0 %v90
    %v138 = vpop.f32.mrb[0].mxu0
    %v139 = vadd.f32 %v59, %v138
    %v140 = vpop.f32.mrb[0].mxu0
    %v141 = vpop.f32.mrb[0].mxu0
    %v142 = vadd.f32 %v64, %v141
    %v143 = vpop.f32.mrb[0].mxu0
    %144 = vdwg.mxu0
    %v145 = vmul.f32 %v131, 0.01
    %v146 = vmul.f32 %v134, 0.01
    %v147 = vmul.f32 %v139, 0.01
    %v148 = vmul.f32 %v142, 0.01
    %v149 = vmax.f32 %v131, %v145
    %v150 = vmax.f32 %v134, %v146
    %v151 = vmax.f32 %v139, %v147
    %v152 = vmax.f32 %v142, %v148
    %v153 = vpack.c.bf16 %v150, %v149
    %v154 = vpack.c.bf16 %v152, %v151
    %v155 = vld [vmem:[%s2] sm:$0xf]
    %v156 = vld [vmem:[%s2 + $0x4] sm:$0xf]
    %v157 = vld [vmem:[%s2 + $0x8] sm:$0xf]
    %v158 = vld [vmem:[%s2 + $0xc] sm:$0xf]
    %v159 = vld [vmem:[%s3 + $0x20] sm:$0xff]
    %v160 = vld [vmem:[%s3 + $0x28] sm:$0xff]
    %v161 = vld [vmem:[%s3 + $0x30] sm:$0xff]
    %v162 = vld [vmem:[%s3 + $0x38] sm:$0xff]
    %164 = vset.pattern.permute.xlu0 0
    %165 = vperm.xlu0 %164, %v159
    %v166 = vpop.permute.xlu0 %165
    %169 = vset.pattern.permute.xlu0 0
    %170 = vperm.xlu0 %169, %v160
    %v171 = vpop.permute.xlu0 %170
    %174 = vset.pattern.permute.xlu0 0
    %175 = vperm.xlu0 %174, %v161
    %v176 = vpop.permute.xlu0 %175
    %179 = vset.pattern.permute.xlu0 0
    %180 = vperm.xlu0 %179, %v162
    %v181 = vpop.permute.xlu0 %180
    %v187 = vunpack.c.l.b16 %v155
    %v188 = vunpack.c.l.b16 %v156
    %v189 = vunpack.c.l.b16 %v157
    %v190 = vunpack.c.l.b16 %v158
    %v191 = vpack.c.b16 %v188, %v187
    %v192 = vpack.c.b16 %v190, %v189
    %vm193 = vcmask 261120
    %v195 = vsel %vm193, %v191, 0
    %v198 = vsel %vm193, %v192, 0
    %200 = vmatprep.subr.bf16.mxu0 0
    %201 = vmatpush1.bf16.msra.mxu0 %v153
    %202 = vmatprep.subr.bf16.mxu0 0
    %203 = vmatpush1.bf16.msra.mxu0 %v154
    %204 = vmatprep.subr.bf16.mxu0 0
    %205 = vmatpush1.bf16.msra.mxu0 0
    %206 = vmatprep.subr.bf16.mxu0 0
    %207 = vmatpush1.bf16.msra.mxu0 0
    %208 = vmatprep.subr.bf16.mxu0 0
    %209 = vmatpush1.bf16.msra.mxu0 0
    %210 = vmatprep.subr.bf16.mxu0 0
    %211 = vmatpush1.bf16.msra.mxu0 0
    %212 = vmatprep.subr.bf16.mxu0 0
    %213 = vmatpush1.bf16.msra.mxu0 0
    %214 = vmatprep.subr.bf16.mxu0 0
    %215 = vmatpush1.bf16.msra.mxu0 0
    %216 = vmatprep.subr.bf16.mxu0 0
    %217 = vmatpush1.bf16.msra.mxu0 0
    %218 = vmatprep.subr.bf16.mxu0 0
    %219 = vmatpush1.bf16.msra.mxu0 0
    %220 = vmatprep.subr.bf16.mxu0 0
    %221 = vmatpush1.bf16.msra.mxu0 0
    %222 = vmatprep.subr.bf16.mxu0 0
    %223 = vmatpush1.bf16.msra.mxu0 0
    %224 = vmatprep.subr.bf16.mxu0 0
    %225 = vmatpush1.bf16.msra.mxu0 0
    %226 = vmatprep.subr.bf16.mxu0 0
    %227 = vmatpush1.bf16.msra.mxu0 0
    %228 = vmatprep.subr.bf16.mxu0 0
    %229 = vmatpush1.bf16.msra.mxu0 0
    %230 = vmatprep.subr.bf16.mxu0 0
    %231 = vmatpush1.bf16.msra.mxu0 0
    %232 = vmatprep.mubr.bf16.mxu0 0
    %233 = vmatmul.mubr.bf16.gmra.mrb[0].mxu0 %v195
    %v234 = vpop.f32.mrb[0].mxu0
    %v235 = vadd.f32 %v166, %v234
    %v236 = vpop.f32.mrb[0].mxu0
    %v237 = vpop.f32.mrb[0].mxu0
    %v238 = vadd.f32 %v171, %v237
    %v239 = vpop.f32.mrb[0].mxu0
    %240 = vmatprep.mubr.bf16.mxu0 0
    %241 = vmatmul.mubr.bf16.gmra.mrb[0].mxu0 %v198
    %v242 = vpop.f32.mrb[0].mxu0
    %v243 = vadd.f32 %v176, %v242
    %v244 = vpop.f32.mrb[0].mxu0
    %v245 = vpop.f32.mrb[0].mxu0
    %v246 = vadd.f32 %v181, %v245
    %v247 = vpop.f32.mrb[0].mxu0
    %248 = vdwg.mxu0
    %v249 = vmul.f32 %v235, 0.01
    %v250 = vmul.f32 %v238, 0.01
    %v251 = vmul.f32 %v243, 0.01
    %v252 = vmul.f32 %v246, 0.01
    %v253 = vmax.f32 %v235, %v249
    %v254 = vmax.f32 %v238, %v250
    %v255 = vmax.f32 %v243, %v251
    %v256 = vmax.f32 %v246, %v252
    %v257 = vld [vmem:[%s3 + $0x40] sm:$0xff]
    %v258 = vld [vmem:[%s3 + $0x48] sm:$0xff]
    %v259 = vld [vmem:[%s3 + $0x50] sm:$0xff]
    %v260 = vld [vmem:[%s3 + $0x58] sm:$0xff]
    %262 = vset.pattern.permute.xlu0 0
    %263 = vperm.xlu0 %262, %v257
    %v264 = vpop.permute.xlu0 %263
    %267 = vset.pattern.permute.xlu0 0
    %268 = vperm.xlu0 %267, %v258
    %v269 = vpop.permute.xlu0 %268
    %272 = vset.pattern.permute.xlu0 0
    %273 = vperm.xlu0 %272, %v259
    %v274 = vpop.permute.xlu0 %273
    %277 = vset.pattern.permute.xlu0 0
    %278 = vperm.xlu0 %277, %v260
    %v279 = vpop.permute.xlu0 %278
    %v281 = vmul.f32 %v253, %v264
    %v282 = vmul.f32 %v254, %v269
    %v283 = vmul.f32 %v255, %v274
    %v284 = vmul.f32 %v256, %v279
    %v285 = vadd.f32 %v281, %v282
    %v286 = vadd.f32 %v285, %v283
    %v287 = vadd.f32 %v286, %v284
    %v288 = vrot.slane %v287, 4
    %v289 = vadd.f32 %v287, %v288
    %v290 = vrot.slane %v289, 2
    %v291 = vadd.f32 %v289, %v290
    %v292 = vrot.slane %v291, 1
    %v293 = vadd.f32 %v291, %v292
    %s294 = sld [smem:[#allocation2]]
    %v295 = vstv %s294
    %v296 = vadd.f32 %v293, %v295
    %v297 = vmul.f32 %v296, 0.01
    %v298 = vmax.f32 %v296, %v297
    %s299 = sld [smem:[#allocation2 + $0x1]]
    %v300 = vstv %s299
    %v301 = vmul.f32 %v298, %v300
    %s302 = sld [smem:[#allocation2 + $0x2]]
    %v303 = vstv %s302
    %v304 = vadd.f32 %v301, %v303
    %305 = vst [vmem:[#allocation5] sm:$0x1] %v304
    // Predicated region
    $region26: #{tpu_custom_call.1} parent=1 // pred_check
      _
    $region27: #{tpu_custom_call.1} parent=1 // pred_check_branch
      %307 = sbr.rel (0) target = $region29
    $region28: #{tpu_custom_call.1} parent=1 // pred_region
      %s309 = ssub.s32 16, 16
      %310 = vsyncadd [#allocation3], %s309
      %s312 = sshll.u32 [#allocation5], 4
      %s313 = int_to_ptr.vmem [resolvable:$true] %s312
      %315 = dma.vmem_to_hbm [thread:$0]  %s313, 16, %s5, [#allocation3]
    $region29: #{tpu_custom_call.1} parent=1 // pred_fallthru
      _
    // Predicated region
    $region30: #{tpu_custom_call.1} parent=1 // pred_check
      _
    $region31: #{tpu_custom_call.1} parent=1 // pred_check_branch
      %317 = sbr.rel (0) target = $region33
    $region32: #{tpu_custom_call.1} parent=1 // pred_region
      %318 = dma.done [#allocation3], 16
    $region33: #{tpu_custom_call.1} parent=1 // pred_fallthru
      _
    %319 = vsyncpa [#allocation3], 1
    %320 = vsyncpa [#allocation4], 1

</llo_original>
